<compile_context>
chip_gen: v7x
topology: tpu7x:2x2x1
jax: 0.10.0
libtpu: 0.0.40
codegen_flags: <defaults>
</compile_context>

<pallas_src>
import functools

import jax
import jax.numpy as jnp
from jax.experimental import pallas as pl
from jax.experimental.pallas import tpu as pltpu


def _round_up(x, m):
    return ((x + m - 1) // m) * m


def _cdiv(a, b):
    return -(-a // b)


def _front_pad(k):
    # PyTorch reference: front = k - 1 - (k - 1) // 2
    return k - 1 - (k - 1) // 2


def _end_pad(k):
    return (k - 1) // 2


def _pick_tiling(R8, l_buf, l_pad):
    """Row-tile size + VMEM limit, adapted to the TPU generation."""
    try:
        info = pltpu.get_tpu_info()
        vmem_cap = int(getattr(info, "vmem_capacity_bytes", 64 << 20))
    except Exception:
        vmem_cap = 64 << 20

    if vmem_cap >= (100 << 20):
        # v5e / v6e: 128 MiB VMEM, single TensorCore -> one big block, no step cap.
        budget, limit, num_tc = 88 << 20, 100 << 20, 1
    else:
        # v7x-class (64 MiB per core) or unknown: conservative, 2 TensorCores.
        budget, limit, num_tc = 40 << 20, 56 << 20, 2

    # Double-buffered f32 input block + two double-buffered f32 output blocks.
    per_row = 4 * (2 * l_buf + 4 * l_pad)
    tr = (budget // per_row) // 8 * 8
    tr = max(8, min(tr, R8))

    if num_tc == 2 and R8 >= 16:
        steps = _cdiv(R8, tr)
        if steps == 1:
            tr = _round_up(_cdiv(R8, 2), 8)          # give both TCs work
        elif steps % 2 == 1:
            tr = max(8, _round_up(_cdiv(R8, steps + 1), 8))  # even step count

    limit = max(limit, 8 * per_row + (4 << 20))       # always cover min usage
    return tr, int(limit)


def _make_kernel(kernel_sizes, F, l_pad, TR, RC, CC):
    """Kernel body. Blocks are (TR rows, time-on-lanes)."""
    E = len(kernel_sizes)
    order = sorted(range(E), key=lambda e: kernel_sizes[e])   # ascending kernel size
    n_row_chunks = TR // RC

    def kernel(xb_ref, w_ref, b_ref, seasonal_ref, trend_ref):
        # Scalar expert parameters (SMEM), read once.
        w = [w_ref[e] for e in range(E)]
        b = [b_ref[e] for e in range(E)]

        def process_rows(r0):
            rows = pl.ds(r0, RC)
            for c0 in range(0, l_pad, CC):
                # Aligned slice of the original series for this chunk (F, c0, CC
                # are all multiples of 128 -> unmasked full-width loads).
                x = xb_ref[rows, pl.ds(F + c0, CC)]

                # Pass 1: softmax-stabilizing max over expert logits (VPU only).
                m = x * w[0] + b[0]
                for e in range(1, E):
                    m = jnp.maximum(m, x * w[e] + b[e])

                # Pass 2: nested incremental window sums + direct softmax combine.
                denom = jnp.zeros_like(x)
                num = jnp.zeros_like(x)
                wsum = None
                cur_lo = cur_hi = 0   # inclusive relative-offset range summed so far
                for e in order:
                    k = kernel_sizes[e]
                    lo, hi = -_front_pad(k), _end_pad(k)   # nested across sorted k
                    if wsum is None:
                        wsum = xb_ref[rows, pl.ds(F + c0 + lo, CC)]
                        new_terms = list(range(lo + 1, hi + 1))
                    else:
                        new_terms = (list(range(lo, cur_lo))
                                     + list(range(cur_hi + 1, hi + 1)))
                    for d in new_terms:
                        wsum = wsum + xb_ref[rows, pl.ds(F + c0 + d, CC)]
                    cur_lo, cur_hi = lo, hi

                    p = jnp.exp(x * w[e] + (b[e] - m))       # one EUP exp / expert
                    denom = denom + p
                    num = num + wsum * (p * (1.0 / float(k)))  # trend_e = wsum / k

                trend = num * pl.reciprocal(denom, approx=False)
                trend_ref[rows, pl.ds(c0, CC)] = trend.astype(trend_ref.dtype)
                seasonal_ref[rows, pl.ds(c0, CC)] = (x - trend).astype(seasonal_ref.dtype)

        if n_row_chunks == 1:
            process_rows(0)                        # fully static indices
        else:
            @pl.loop(0, n_row_chunks)
            def _(rc):
                process_rows(pl.multiple_of(rc * RC, RC))

    return kernel


def moe_decomposition(x, w, b, kernel_sizes):
    """Pallas implementation of MixtureOfExpertsDecomposition.forward.

    x : (B, L, V) float32
    w : (E, 1)    float32   -- nn.Linear(1, E).weight
    b : (E,)      float32   -- nn.Linear(1, E).bias
    Returns (seasonal, trend), each (B, L, V).
    """
    B, L, V = x.shape
    kernel_sizes = tuple(int(k) for k in kernel_sizes)
    E = len(kernel_sizes)
    assert w.shape == (E, 1) and b.shape == (E,)

    kmax = max(kernel_sizes)
    front_max = _front_pad(kmax)
    end_max = _end_pad(kmax)
    F = _round_up(front_max, 128)                 # 128-aligned offset of x in the buffer
    l_pad = _round_up(L, 128)                     # lane-dense output width
    l_buf = _round_up(F + l_pad + end_max, 128)   # padded buffer width

    R = B * V
    R8 = _round_up(R, 8)

    # Layout glue (XLA): put time on the lane axis, collapse (B, V) into rows,
    # and build ONE edge-replicate-padded buffer.
    xt = jnp.transpose(x, (0, 2, 1)).astype(jnp.float32).reshape(R, L)
    pieces = []
    if F > 0:
        pieces.append(jnp.repeat(xt[:, :1], F, axis=1))
    pieces.append(xt)
    tail = l_buf - F - L
    if tail > 0:
        pieces.append(jnp.repeat(xt[:, L - 1:L], tail, axis=1))
    x_buf = jnp.concatenate(pieces, axis=1) if len(pieces) > 1 else pieces[0]
    if R8 > R:
        x_buf = jnp.concatenate(
            [x_buf, jnp.zeros((R8 - R, l_buf), jnp.float32)], axis=0)
    # x_buf: (R8, l_buf)

    TR, vmem_limit = _pick_tiling(R8, l_buf, l_pad)
    RC = 8
    CC = 128
    for cc in (512, 384, 256, 128):
        if l_pad % cc == 0:
            CC = cc
            break

    grid = (_cdiv(R8, TR),)
    kernel = _make_kernel(kernel_sizes, F, l_pad, TR, RC, CC)

    seasonal_f, trend_f = pl.pallas_call(
        kernel,
        grid=grid,
        in_specs=[
            pl.BlockSpec((TR, l_buf), lambda i: (i, 0)),
            pl.BlockSpec(memory_space=pltpu.MemorySpace.SMEM),   # w (E,)
            pl.BlockSpec(memory_space=pltpu.MemorySpace.SMEM),   # b (E,)
        ],
        out_specs=(
            pl.BlockSpec((TR, l_pad), lambda i: (i, 0)),
            pl.BlockSpec((TR, l_pad), lambda i: (i, 0)),
        ),
        out_shape=(
            jax.ShapeDtypeStruct((R8, l_pad), jnp.float32),
            jax.ShapeDtypeStruct((R8, l_pad), jnp.float32),
        ),
        compiler_params=pltpu.CompilerParams(
            dimension_semantics=("parallel",),
            vmem_limit_bytes=vmem_limit,
        ),
    )(x_buf, w.reshape(E).astype(jnp.float32), b.astype(jnp.float32))

    # Strip row/lane padding and go back to (B, L, V).
    seasonal = jnp.transpose(
        seasonal_f[:R, :L].reshape(B, V, L), (0, 2, 1)).astype(x.dtype)
    trend = jnp.transpose(
        trend_f[:R, :L].reshape(B, V, L), (0, 2, 1)).astype(x.dtype)
    return seasonal, trend


def moe_decomposition_ref(x, w, b, kernel_sizes):
    """Pure-JAX reference matching the PyTorch module semantics."""
    B, L, V = x.shape
    trends = []
    for k in kernel_sizes:
        front = k - 1 - (k - 1) // 2
        end = (k - 1) // 2
        xp = jnp.concatenate(
            [
                jnp.repeat(x[:, 0:1, :], front, axis=1),
                x,
                jnp.repeat(x[:, L - 1:L, :], end, axis=1),
            ],
            axis=1,
        )
        t = jnp.stack([xp[:, j:j + L, :] for j in range(k)], axis=0).mean(axis=0)
        trends.append(t)
    trends = jnp.stack(trends, axis=-1)                    # (B, L, V, E)
    logits = x[..., None] * w[:, 0] + b                    # (B, L, V, E)
    weights = jax.nn.softmax(logits, axis=-1)
    trend = jnp.sum(trends * weights, axis=-1)
    seasonal = x - trend
    return seasonal, trend


if __name__ == "__main__":
    # Small, deterministic example: x is batch_size x seq_len x n_vars.
    B, L, V = 2, 16, 4
    kernel_sizes = (3, 5, 7)
    E = len(kernel_sizes)

    key = jax.random.PRNGKey(0)
    kx, kw, kb = jax.random.split(key, 3)
    x = jax.random.normal(kx, (B, L, V), dtype=jnp.float32)
    # nn.Linear(1, E): weight (E, 1), bias (E,), both ~ U(-1, 1) (fan_in = 1).
    w = jax.random.uniform(kw, (E, 1), minval=-1.0, maxval=1.0, dtype=jnp.float32)
    b = jax.random.uniform(kb, (E,), minval=-1.0, maxval=1.0, dtype=jnp.float32)

    run = jax.jit(functools.partial(moe_decomposition, kernel_sizes=kernel_sizes))
    seasonal, trend = run(x, w, b)
    jax.block_until_ready((seasonal, trend))

    seasonal_ref, trend_ref = moe_decomposition_ref(x, w, b, kernel_sizes)
    assert seasonal.shape == (B, L, V) and trend.shape == (B, L, V)
    assert jnp.allclose(trend, trend_ref, atol=1e-4, rtol=1e-4)
    assert jnp.allclose(seasonal, seasonal_ref, atol=1e-4, rtol=1e-4)
    # Exact decomposition identity (seasonal = x - trend computed in-kernel).
    assert jnp.allclose(seasonal + trend, x, atol=1e-5, rtol=1e-5)

    print("KERNEL_OK")
</pallas_src>

<mosaic_0001>
module attributes {stable_mosaic.version = 11 : i64} {
  func.func @kernel(%arg0: i32, %arg1: memref<8x384xf32, #tpu.memory_space<vmem>>, %arg2: memref<3xf32, #tpu.memory_space<smem>>, %arg3: memref<3xf32, #tpu.memory_space<smem>>, %arg4: memref<8x128xf32, #tpu.memory_space<vmem>>, %arg5: memref<8x128xf32, #tpu.memory_space<vmem>>) attributes {dimension_semantics = [#tpu.dimension_semantics<parallel>], iteration_bounds = array<i64: 1>, scalar_prefetch = 0 : i64, scratch_operands = 0 : i64, tpu.core_type = #tpu.core_type<tc>, window_params = [{transform_indices = @transform_0, window_bounds = array<i64: 8, 384>}, {transform_indices = @transform_1, window_bounds = array<i64: 3>}, {transform_indices = @transform_2, window_bounds = array<i64: 3>}, {transform_indices = @transform_3, window_bounds = array<i64: 8, 128>}, {transform_indices = @transform_4, window_bounds = array<i64: 8, 128>}]} {
    %c0 = arith.constant 0 : index
    %0 = memref.load %arg2[%c0] : memref<3xf32, #tpu.memory_space<smem>>
    %c1 = arith.constant 1 : index
    %1 = memref.load %arg2[%c1] : memref<3xf32, #tpu.memory_space<smem>>
    %c2 = arith.constant 2 : index
    %2 = memref.load %arg2[%c2] : memref<3xf32, #tpu.memory_space<smem>>
    %c0_0 = arith.constant 0 : index
    %3 = memref.load %arg3[%c0_0] : memref<3xf32, #tpu.memory_space<smem>>
    %c1_1 = arith.constant 1 : index
    %4 = memref.load %arg3[%c1_1] : memref<3xf32, #tpu.memory_space<smem>>
    %c2_2 = arith.constant 2 : index
    %5 = memref.load %arg3[%c2_2] : memref<3xf32, #tpu.memory_space<smem>>
    %c0_3 = arith.constant 0 : index
    %c128 = arith.constant 128 : index
    %6 = vector.load %arg1[%c0_3, %c128] : memref<8x384xf32, #tpu.memory_space<vmem>>, vector<8x128xf32>
    %7 = vector.broadcast %0 : f32 to vector<8x128xf32>
    %8 = arith.mulf %6, %7 : vector<8x128xf32>
    %9 = vector.broadcast %3 : f32 to vector<8x128xf32>
    %10 = arith.addf %8, %9 : vector<8x128xf32>
    %11 = vector.broadcast %1 : f32 to vector<8x128xf32>
    %12 = arith.mulf %6, %11 : vector<8x128xf32>
    %13 = vector.broadcast %4 : f32 to vector<8x128xf32>
    %14 = arith.addf %12, %13 : vector<8x128xf32>
    %15 = arith.maximumf %10, %14 : vector<8x128xf32>
    %16 = vector.broadcast %2 : f32 to vector<8x128xf32>
    %17 = arith.mulf %6, %16 : vector<8x128xf32>
    %18 = vector.broadcast %5 : f32 to vector<8x128xf32>
    %19 = arith.addf %17, %18 : vector<8x128xf32>
    %20 = arith.maximumf %15, %19 : vector<8x128xf32>
    %cst = arith.constant 0.000000e+00 : f32
    %21 = vector.broadcast %cst : f32 to vector<8x128xf32>
    %cst_4 = arith.constant 0.000000e+00 : f32
    %22 = vector.broadcast %cst_4 : f32 to vector<8x128xf32>
    %c0_5 = arith.constant 0 : index
    %c127 = arith.constant 127 : index
    %23 = vector.load %arg1[%c0_5, %c127] : memref<8x384xf32, #tpu.memory_space<vmem>>, vector<8x128xf32>
    %c0_6 = arith.constant 0 : index
    %c128_7 = arith.constant 128 : index
    %24 = vector.load %arg1[%c0_6, %c128_7] : memref<8x384xf32, #tpu.memory_space<vmem>>, vector<8x128xf32>
    %25 = arith.addf %23, %24 : vector<8x128xf32>
    %c0_8 = arith.constant 0 : index
    %c129 = arith.constant 129 : index
    %26 = vector.load %arg1[%c0_8, %c129] : memref<8x384xf32, #tpu.memory_space<vmem>>, vector<8x128xf32>
    %27 = arith.addf %25, %26 : vector<8x128xf32>
    %28 = vector.broadcast %0 : f32 to vector<8x128xf32>
    %29 = arith.mulf %6, %28 : vector<8x128xf32>
    %30 = vector.broadcast %3 : f32 to vector<8x128xf32>
    %31 = arith.subf %30, %20 : vector<8x128xf32>
    %32 = arith.addf %29, %31 : vector<8x128xf32>
    %33 = math.exp %32 : vector<8x128xf32>
    %34 = arith.addf %21, %33 : vector<8x128xf32>
    %cst_9 = arith.constant 0.333333343 : f32
    %35 = vector.broadcast %cst_9 : f32 to vector<8x128xf32>
    %36 = arith.mulf %33, %35 : vector<8x128xf32>
    %37 = arith.mulf %27, %36 : vector<8x128xf32>
    %38 = arith.addf %22, %37 : vector<8x128xf32>
    %c0_10 = arith.constant 0 : index
    %c126 = arith.constant 126 : index
    %39 = vector.load %arg1[%c0_10, %c126] : memref<8x384xf32, #tpu.memory_space<vmem>>, vector<8x128xf32>
    %40 = arith.addf %27, %39 : vector<8x128xf32>
    %c0_11 = arith.constant 0 : index
    %c130 = arith.constant 130 : index
    %41 = vector.load %arg1[%c0_11, %c130] : memref<8x384xf32, #tpu.memory_space<vmem>>, vector<8x128xf32>
    %42 = arith.addf %40, %41 : vector<8x128xf32>
    %43 = vector.broadcast %1 : f32 to vector<8x128xf32>
    %44 = arith.mulf %6, %43 : vector<8x128xf32>
    %45 = vector.broadcast %4 : f32 to vector<8x128xf32>
    %46 = arith.subf %45, %20 : vector<8x128xf32>
    %47 = arith.addf %44, %46 : vector<8x128xf32>
    %48 = math.exp %47 : vector<8x128xf32>
    %49 = arith.addf %34, %48 : vector<8x128xf32>
    %cst_12 = arith.constant 2.000000e-01 : f32
    %50 = vector.broadcast %cst_12 : f32 to vector<8x128xf32>
    %51 = arith.mulf %48, %50 : vector<8x128xf32>
    %52 = arith.mulf %42, %51 : vector<8x128xf32>
    %53 = arith.addf %38, %52 : vector<8x128xf32>
    %c0_13 = arith.constant 0 : index
    %c125 = arith.constant 125 : index
    %54 = vector.load %arg1[%c0_13, %c125] : memref<8x384xf32, #tpu.memory_space<vmem>>, vector<8x128xf32>
    %55 = arith.addf %42, %54 : vector<8x128xf32>
    %c0_14 = arith.constant 0 : index
    %c131 = arith.constant 131 : index
    %56 = vector.load %arg1[%c0_14, %c131] : memref<8x384xf32, #tpu.memory_space<vmem>>, vector<8x128xf32>
    %57 = arith.addf %55, %56 : vector<8x128xf32>
    %58 = vector.broadcast %2 : f32 to vector<8x128xf32>
    %59 = arith.mulf %6, %58 : vector<8x128xf32>
    %60 = vector.broadcast %5 : f32 to vector<8x128xf32>
    %61 = arith.subf %60, %20 : vector<8x128xf32>
    %62 = arith.addf %59, %61 : vector<8x128xf32>
    %63 = math.exp %62 : vector<8x128xf32>
    %64 = arith.addf %49, %63 : vector<8x128xf32>
    %cst_15 = arith.constant 0.142857149 : f32
    %65 = vector.broadcast %cst_15 : f32 to vector<8x128xf32>
    %66 = arith.mulf %63, %65 : vector<8x128xf32>
    %67 = arith.mulf %57, %66 : vector<8x128xf32>
    %68 = arith.addf %53, %67 : vector<8x128xf32>
    %69 = tpu.reciprocal %64 : vector<8x128xf32> -> vector<8x128xf32>
    %70 = arith.mulf %68, %69 : vector<8x128xf32>
    %c0_16 = arith.constant 0 : index
    %c0_17 = arith.constant 0 : index
    %71 = vector.load %arg5[%c0_16, %c0_17] : memref<8x128xf32, #tpu.memory_space<vmem>>, vector<8x128xf32>
    tpu.vector_store %arg5[%c0_16, %c0_17], %70 {strides = array<i32>} : memref<8x128xf32, #tpu.memory_space<vmem>>, vector<8x128xf32>,
    %72 = arith.subf %6, %70 : vector<8x128xf32>
    %c0_18 = arith.constant 0 : index
    %c0_19 = arith.constant 0 : index
    %73 = vector.load %arg4[%c0_18, %c0_19] : memref<8x128xf32, #tpu.memory_space<vmem>>, vector<8x128xf32>
    tpu.vector_store %arg4[%c0_18, %c0_19], %72 {strides = array<i32>} : memref<8x128xf32, #tpu.memory_space<vmem>>, vector<8x128xf32>,
    return
  }
  func.func @transform_0(%arg0: i32) -> (i32, i32) {
    %c0_i32 = arith.constant 0 : i32
    %c0_i32_0 = arith.constant 0 : i32
    return %arg0, %c0_i32 : i32, i32
  }
  func.func @transform_1(%arg0: i32) -> i32 {
    %c0_i32 = arith.constant 0 : i32
    %c0_i32_0 = arith.constant 0 : i32
    return %c0_i32 : i32
  }
  func.func @transform_2(%arg0: i32) -> i32 {
    %c0_i32 = arith.constant 0 : i32
    %c0_i32_0 = arith.constant 0 : i32
    return %c0_i32 : i32
  }
  func.func @transform_3(%arg0: i32) -> (i32, i32) {
    %c0_i32 = arith.constant 0 : i32
    %c0_i32_0 = arith.constant 0 : i32
    return %arg0, %c0_i32 : i32, i32
  }
  func.func @transform_4(%arg0: i32) -> (i32, i32) {
    %c0_i32 = arith.constant 0 : i32
    %c0_i32_0 = arith.constant 0 : i32
    return %arg0, %c0_i32 : i32, i32
  }
}

</mosaic_0001>

<llo_original>
// kernel: moe_decomposition.1
$region0: #{moe_decomposition.1}
  #allocation0 [shape = 'u32[]', space=smem, size = 0x4, offset = 0x4, fixed_abs, tag = 'smem constant byte address 0x4 - core index']
  #allocation1 [shape = 'u32[144,128]{1,0:T(1,128)}', space=vmem, size = 0x12000, scoped, tag = 'internal scratch']
  %s0 = inlined_call_operand.vmem [shape: f32[8,384], index: 0, kind: input, shape index: {}]
  %s1 = inlined_call_operand.vmem [shape: f32[3], index: 1, kind: input, shape index: {}]
  %s2 = inlined_call_operand.vmem [shape: f32[3], index: 2, kind: input, shape index: {}]
  %s3 = inlined_call_operand.hbm [shape: f32[8,128], index: 3, kind: output, shape index: {0}]
  %s4 = inlined_call_operand.hbm [shape: f32[8,128], index: 4, kind: output, shape index: {1}]
  %5 = xla_tuple %s3, %s4
  %s6 = sld [smem:[#allocation0]]
  $region38: #{moe_decomposition.1} parent=0
    _
  %s8 = ssub.s32 1, %s6
  %s9 = scalar_select 0, %s8, %s6
  $region1: #{moe_decomposition.1} parent=0
    #allocation2 [shape = 'u8[512]{0}', space=smem, size = 0x200, scoped, tag = 'input window, operand 1, single buffered']
    #allocation3 [shape = 's32[1]{0}', space=sflag, size = 0x4, scoped, tag = 'scoped memory for moe_decomposition.1']
    #allocation4 [shape = 's32[1]{0}', space=sflag, size = 0x4, scoped, tag = 'scoped memory for moe_decomposition.1']
    #allocation5 [shape = 'u8[512]{0}', space=smem, size = 0x200, scoped, tag = 'input window, operand 2, single buffered']
    #allocation6 [shape = 's32[1]{0}', space=sflag, size = 0x4, scoped, tag = 'scoped memory for moe_decomposition.1']
    #allocation7 [shape = 'u8[4096]{0}', space=vmem, size = 0x1000, scoped, tag = 'output window, operand 0, single buffered']
    #allocation8 [shape = 'u8[4096]{0}', space=vmem, size = 0x1000, scoped, tag = 'output window, operand 1, single buffered']
    #allocation9 [shape = 's32[1]{0}', space=sflag, size = 0x4, scoped, tag = 'scoped memory for moe_decomposition.1']
    %10 = vsyncpa [#allocation4], 0
    %11 = vsyncpa [#allocation6], 0
    %12 = vsyncpa [#allocation3], 0
    %13 = vsyncpa [#allocation9], 0
    // Predicated region
    $region2: #{moe_decomposition.1} parent=1 // pred_check
      _
    $region3: #{moe_decomposition.1} parent=1 // pred_check_branch
      %15 = sbr.rel (0) target = $region5
    $region4: #{moe_decomposition.1} parent=1 // pred_region
      _
    $region5: #{moe_decomposition.1} parent=1 // pred_fallthru
      _
    // Predicated region
    $region6: #{moe_decomposition.1} parent=1 // pred_check
      _
    $region7: #{moe_decomposition.1} parent=1 // pred_check_branch
      %17 = sbr.rel (0) target = $region9
    $region8: #{moe_decomposition.1} parent=1 // pred_region
      %s19 = ssub.s32 16, 16
      %20 = vsyncadd [#allocation4], %s19
      %s22 = sshll.u32 %s1, 4
      %s23 = int_to_ptr.vmem [resolvable:$true] %s22
      %25 = dma.vmem_to_smem %s23, 16, [#allocation2], [#allocation4]
    $region9: #{moe_decomposition.1} parent=1 // pred_fallthru
      _
    // Predicated region
    $region10: #{moe_decomposition.1} parent=1 // pred_check
      _
    $region11: #{moe_decomposition.1} parent=1 // pred_check_branch
      %27 = sbr.rel (0) target = $region13
    $region12: #{moe_decomposition.1} parent=1 // pred_region
      %s29 = ssub.s32 16, 16
      %30 = vsyncadd [#allocation6], %s29
      %s32 = sshll.u32 %s2, 4
      %s33 = int_to_ptr.vmem [resolvable:$true] %s32
      %35 = dma.vmem_to_smem %s33, 16, [#allocation5], [#allocation6]
    $region13: #{moe_decomposition.1} parent=1 // pred_fallthru
      _
    // Predicated region
    $region14: #{moe_decomposition.1} parent=1 // pred_check
      _
    $region15: #{moe_decomposition.1} parent=1 // pred_check_branch
      %37 = sbr.rel (0) target = $region17
    $region16: #{moe_decomposition.1} parent=1 // pred_region
      %38 = dma.done [#allocation4], 16
    $region17: #{moe_decomposition.1} parent=1 // pred_fallthru
      _
    // Predicated region
    $region18: #{moe_decomposition.1} parent=1 // pred_check
      _
    $region19: #{moe_decomposition.1} parent=1 // pred_check_branch
      %40 = sbr.rel (0) target = $region21
    $region20: #{moe_decomposition.1} parent=1 // pred_region
      %41 = dma.done [#allocation6], 16
    $region21: #{moe_decomposition.1} parent=1 // pred_fallthru
      _
    %42 = sfence
    %s43 = sld [smem:[#allocation2]]
    %s44 = sld [smem:[#allocation2 + $0x1]]
    %s45 = sld [smem:[#allocation2 + $0x2]]
    %s46 = sld [smem:[#allocation5]]
    %s47 = sld [smem:[#allocation5 + $0x1]]
    %s48 = sld [smem:[#allocation5 + $0x2]]
    %v49 = vld [vmem:[%s0 + $0x8] sm:$0xff]
    %v50 = vstv %s43
    %v51 = vmul.f32 %v49, %v50
    %v52 = vstv %s46
    %v53 = vadd.f32 %v51, %v52
    %v54 = vstv %s44
    %v55 = vmul.f32 %v49, %v54
    %v56 = vstv %s47
    %v57 = vadd.f32 %v55, %v56
    %v58 = vmax.f32 %v53, %v57
    %v59 = vstv %s45
    %v60 = vmul.f32 %v49, %v59
    %v61 = vstv %s48
    %v62 = vadd.f32 %v60, %v61
    %v63 = vmax.f32 %v58, %v62
    %v64 = vld [vmem:[%s0] sm:$0xff]
    %66 = vrot.lane.b32.xlu0 %v49, 127
    %v67 = vpop.permute.xlu0 %66
    %v69 = vadd.f32 %v64, %v67
    %v70 = vadd.f32 %v49, %v67
    %v71 = vld [vmem:[%s0 + $0x8] sm:$0xff]
    %v72 = vld [vmem:[%s0 + $0x10] sm:$0xff]
    %75 = vrot.lane.b32.xlu0 %v71, 126
    %v76 = vpop.permute.xlu0 %75
    %77 = vrot.lane.b32.xlu0 %v72, 126
    %v78 = vpop.permute.xlu0 %77
    %vm79 = vcmask 1031168
    %v80 = vsel %vm79, %v76, %v78
    %v83 = vadd.f32 %v69, %v76
    %v84 = vadd.f32 %v70, %v80
    %v85 = vsub.f32 %v52, %v63
    %v86 = vadd.f32 %v51, %v85
    %v87 = vmul.f32 %v86, 1.442695
    %v88 = vpow.pop %v87
    %v89 = vadd.f32 %v88, 0.0
    %v90 = vmul.f32 %v88, 0.33333334
    %92 = vrot.lane.b32.xlu0 %v90, 127
    %v93 = vpop.permute.xlu0 %92
    %v95 = vmul.f32 %v83, %v93
    %v96 = vmul.f32 %v84, %v93
    %v97 = vadd.f32 %v95, 0.0
    %v98 = vadd.f32 %v96, 0.0
    %100 = vrot.lane.b32.xlu0 %v64, 1
    %v101 = vpop.permute.xlu0 %100
    %102 = vrot.lane.b32.xlu0 %v49, 1
    %v103 = vpop.permute.xlu0 %102
    %vm104 = vcmask 7168
    %v105 = vsel %vm104, %v101, %v103
    %v108 = vadd.f32 %v83, %v101
    %v109 = vadd.f32 %v84, %v105
    %110 = vrot.lane.b32.xlu0 %v71, 125
    %v111 = vpop.permute.xlu0 %110
    %112 = vrot.lane.b32.xlu0 %v72, 125
    %v113 = vpop.permute.xlu0 %112
    %vm114 = vcmask 1022976
    %v115 = vsel %vm114, %v111, %v113
    %v118 = vadd.f32 %v108, %v111
    %v119 = vadd.f32 %v109, %v115
    %v120 = vsub.f32 %v56, %v63
    %v121 = vadd.f32 %v55, %v120
    %v122 = vmul.f32 %v121, 1.442695
    %v123 = vpow.pop %v122
    %v124 = vadd.f32 %v89, %v123
    %v125 = vmul.f32 %v123, 0.2
    %127 = vrot.lane.b32.xlu0 %v125, 127
    %v128 = vpop.permute.xlu0 %127
    %v130 = vmul.f32 %v118, %v128
    %v131 = vmul.f32 %v119, %v128
    %v132 = vadd.f32 %v97, %v130
    %v133 = vadd.f32 %v98, %v131
    %134 = vrot.lane.b32.xlu0 %v64, 2
    %v135 = vpop.permute.xlu0 %134
    %136 = vrot.lane.b32.xlu0 %v49, 2
    %v137 = vpop.permute.xlu0 %136
    %vm138 = vcmask 15360
    %v139 = vsel %vm138, %v135, %v137
    %v142 = vadd.f32 %v118, %v135
    %v143 = vadd.f32 %v119, %v139
    %144 = vrot.lane.b32.xlu0 %v71, 124
    %v145 = vpop.permute.xlu0 %144
    %146 = vrot.lane.b32.xlu0 %v72, 124
    %v147 = vpop.permute.xlu0 %146
    %vm148 = vcmask 1014784
    %v149 = vsel %vm148, %v145, %v147
    %v152 = vadd.f32 %v142, %v145
    %v153 = vadd.f32 %v143, %v149
    %v154 = vsub.f32 %v61, %v63
    %v155 = vadd.f32 %v60, %v154
    %v156 = vmul.f32 %v155, 1.442695
    %v157 = vpow.pop %v156
    %v158 = vadd.f32 %v124, %v157
    %v159 = vmul.f32 %v157, 0.14285715
    %161 = vrot.lane.b32.xlu0 %v159, 127
    %v162 = vpop.permute.xlu0 %161
    %v164 = vmul.f32 %v152, %v162
    %v165 = vmul.f32 %v153, %v162
    %v166 = vadd.f32 %v132, %v164
    %v167 = vadd.f32 %v133, %v165
    %v168 = vrcp.pop %v158
    %170 = vrot.lane.b32.xlu0 %v168, 127
    %v171 = vpop.permute.xlu0 %170
    %v173 = vmul.f32 %v166, %v171
    %v174 = vmul.f32 %v167, %v171
    %177 = vrot.lane.b32.xlu0 %v173, 1
    %v178 = vpop.permute.xlu0 %177
    %179 = vrot.lane.b32.xlu0 %v174, 1
    %v180 = vpop.permute.xlu0 %179
    %v181 = vsel %vm104, %v178, %v180
    %183 = vst [vmem:[#allocation8] sm:$0xff] %v181
    %v184 = vsub.f32 %v49, %v181
    %185 = vst [vmem:[#allocation7] sm:$0xff] %v184
    // Predicated region
    $region22: #{moe_decomposition.1} parent=1 // pred_check
      _
    $region23: #{moe_decomposition.1} parent=1 // pred_check_branch
      %187 = sbr.rel (0) target = $region25
    $region24: #{moe_decomposition.1} parent=1 // pred_region
      %s189 = ssub.s32 128, 128
      %190 = vsyncadd [#allocation3], %s189
      %s192 = sshll.u32 [#allocation7], 4
      %s193 = int_to_ptr.vmem [resolvable:$true] %s192
      %195 = dma.vmem_to_hbm [thread:$0]  %s193, 128, %s3, [#allocation3]
    $region25: #{moe_decomposition.1} parent=1 // pred_fallthru
      _
    // Predicated region
    $region26: #{moe_decomposition.1} parent=1 // pred_check
      _
    $region27: #{moe_decomposition.1} parent=1 // pred_check_branch
      %197 = sbr.rel (0) target = $region29
    $region28: #{moe_decomposition.1} parent=1 // pred_region
      %s199 = ssub.s32 128, 128
      %200 = vsyncadd [#allocation9], %s199
      %s202 = sshll.u32 [#allocation8], 4
      %s203 = int_to_ptr.vmem [resolvable:$true] %s202
      %205 = dma.vmem_to_hbm [thread:$0]  %s203, 128, %s4, [#allocation9]
    $region29: #{moe_decomposition.1} parent=1 // pred_fallthru
      _
    // Predicated region
    $region30: #{moe_decomposition.1} parent=1 // pred_check
      _
    $region31: #{moe_decomposition.1} parent=1 // pred_check_branch
      %207 = sbr.rel (0) target = $region33
    $region32: #{moe_decomposition.1} parent=1 // pred_region
      %208 = dma.done [#allocation3], 128
    $region33: #{moe_decomposition.1} parent=1 // pred_fallthru
      _
    // Predicated region
    $region34: #{moe_decomposition.1} parent=1 // pred_check
      _
    $region35: #{moe_decomposition.1} parent=1 // pred_check_branch
      %210 = sbr.rel (0) target = $region37
    $region36: #{moe_decomposition.1} parent=1 // pred_region
      %211 = dma.done [#allocation9], 128
    $region37: #{moe_decomposition.1} parent=1 // pred_fallthru
      _
    %212 = vsyncpa [#allocation3], 1
    %213 = vsyncpa [#allocation9], 1
    %214 = vsyncpa [#allocation4], 1
    %215 = vsyncpa [#allocation6], 1

</llo_original>
